<compile_context>
chip_gen: v6e
topology: v6e:2x2x1
jax: 0.10.0
libtpu: 0.0.40
codegen_flags: <defaults>
</compile_context>

<pallas_src>
import functools

import jax
import jax.numpy as jnp
from jax.experimental import pallas as pl
from jax.experimental.pallas import tpu as pltpu

THRESHOLD = 30.0  # surrogate-mode threshold (hard-coded in SurrogateSpike)
LANE = 128        # TPU lane width (last-dim tiling granularity)


# ----------------------------------------------------------------------------
# Kernel: one (neuron_tile, timestep) grid point.
# ----------------------------------------------------------------------------
def izhikevich_kernel(coeffs_ref, times_ref,
                      ic_ref, v0_ref, u0_ref, a_ref, b_ref, c_ref, d_ref,
                      bias_ref, lst0_ref,
                      fired_ref, v_ref, u_ref, lst_ref):
    """Grid = (neuron_tiles, T).  v/u/lst output blocks stay VMEM-resident
    across the whole T sweep for the current neuron tile."""
    t_idx = pl.program_id(1)

    # Load the initial state into the resident output blocks on the first step.
    @pl.when(t_idx == 0)
    def _():
        v_ref[...] = v0_ref[...]
        u_ref[...] = u0_ref[...]
        lst_ref[...] = lst0_ref[...]

    v = v_ref[...]
    u = u_ref[...]

    c0 = coeffs_ref[0]
    c1 = coeffs_ref[1]
    c2 = coeffs_ref[2]
    t_val = times_ref[t_idx]

    # dv = c0*v^2 + c1*v + c2 - u + I + bias   (Horner: one fewer vmul)
    dv = v * (c0 * v + c1) + c2 - u + ic_ref[0] + bias_ref[...]
    du = a_ref[...] * (b_ref[...] * v - u)

    v_new = v + dv
    u_new = u + du

    spike = v_new > THRESHOLD                 # surrogate forward: (v_new>30)
    fired_ref[0] = spike.astype(jnp.float32)
    v_ref[...] = jnp.where(spike, c_ref[...], v_new)
    u_ref[...] = jnp.where(spike, u_new + d_ref[...], u_new)
    lst_ref[...] = jnp.where(spike, t_val, lst_ref[...])


# ----------------------------------------------------------------------------
# Tiling plan.
# ----------------------------------------------------------------------------
def _plan_tiles(num_neurons, batch_size,
                vmem_budget_bytes=16 * 1024 * 1024, max_tn=16 * 1024):
    """Pick (tile_width TN, padded neuron count Np = TN * num_tiles).

    13 f32 operands (9 VMEM inputs + 4 outputs) are pipelined with double
    buffering, so the VMEM footprint is ~13 * 2 * B * TN * 4 bytes.  A
    16 MiB budget fits every generation (v5e 16 MiB scoped default, v6e
    32 MiB, v7x 32 MiB scoped / 64 MiB physical) with headroom.
    """
    per_lane_bytes = 13 * 2 * batch_size * 4
    cap = min(max_tn, vmem_budget_bytes // per_lane_bytes) // LANE * LANE
    cap = max(LANE, cap)
    num_tiles = pl.cdiv(num_neurons, cap)
    # Prefer >= 2 tiles when each stays comfortably large, so the "parallel"
    # grid axis can actually use v7x's second TensorCore.
    if num_tiles == 1 and num_neurons > 4 * LANE:
        num_tiles = 2
    tn = pl.cdiv(pl.cdiv(num_neurons, num_tiles), LANE) * LANE
    return tn, tn * num_tiles


# ----------------------------------------------------------------------------
# Fused multi-step pallas_call.  v, u, last_spike_time (args 3, 4, 10) are
# donated and aliased in-place with the corresponding outputs.
# ----------------------------------------------------------------------------
@functools.partial(jax.jit, static_argnames=("tn",), donate_argnums=(3, 4, 10))
def _izhikevich_call(coeffs, times, ic, v, u, a, b, c, d, bias, lst, *, tn):
    T, B, Np = ic.shape
    num_tiles = Np // tn
    grid = (num_tiles, T)

    state_spec = pl.BlockSpec((B, tn), lambda i, t: (0, i))     # T-invariant
    seq_spec = pl.BlockSpec((1, B, tn), lambda i, t: (t, 0, i))  # per-step
    smem_spec = pl.BlockSpec(memory_space=pltpu.MemorySpace.SMEM)

    state_sd = jax.ShapeDtypeStruct((B, Np), jnp.float32)
    fired_sd = jax.ShapeDtypeStruct((T, B, Np), jnp.float32)

    return pl.pallas_call(
        izhikevich_kernel,
        out_shape=(fired_sd, state_sd, state_sd, state_sd),
        grid=grid,
        in_specs=[smem_spec, smem_spec, seq_spec] + [state_spec] * 8,
        out_specs=(seq_spec, state_spec, state_spec, state_spec),
        # In-place state update: v -> v_out, u -> u_out, lst -> lst_out.
        input_output_aliases={3: 1, 4: 2, 10: 3},
        compiler_params=pltpu.CompilerParams(
            dimension_semantics=("parallel", "arbitrary"),
            vmem_limit_bytes=48 * 1024 * 1024,
        ),
    )(coeffs, times, ic, v, u, a, b, c, d, bias, lst)


# ----------------------------------------------------------------------------
# Stateful layer wrapper (mode='surrogate').
# ----------------------------------------------------------------------------
class IzhikevichLayer:
    """Plain-JAX stateful wrapper around the fused Pallas kernel.

    State and parameters are stored padded to Np (a multiple of the chosen
    neuron tile) so the kernel's in-place aliasing path is zero-copy.
    """

    def __init__(self, num_neurons, batch_size):
        self.N = num_neurons
        self.B = batch_size
        self.tn, self.Np = _plan_tiles(num_neurons, batch_size)
        shape = (self.B, self.Np)
        # Parameters (nn.Parameter fills in the PyTorch __init__).
        self.a = jnp.full(shape, 0.02, dtype=jnp.float32)
        self.b = jnp.full(shape, 0.2, dtype=jnp.float32)
        self.c = jnp.full(shape, -65.0, dtype=jnp.float32)
        self.d = jnp.full(shape, 8.0, dtype=jnp.float32)
        self.bias = jnp.full(shape, 98.0, dtype=jnp.float32)
        # Buffers (PyTorch __init__ sets u = 0; reset() sets u = b*v).
        self.v = jnp.full(shape, -65.0, dtype=jnp.float32)
        self.u = jnp.zeros(shape, dtype=jnp.float32)
        self.last_spike_time = jnp.full(shape, -jnp.inf, dtype=jnp.float32)

    def reset(self):
        shape = (self.B, self.Np)
        self.v = jnp.full(shape, -65.0, dtype=jnp.float32)
        self.u = self.b * self.v
        self.last_spike_time = jnp.full(shape, -jnp.inf, dtype=jnp.float32)

    def run(self, input_currents, times, coeffs):
        """Fused multi-step forward.

        input_currents: (T, B, N) float; times: (T,) float; coeffs: (3,).
        Returns fired of shape (T, B, N) and advances the internal state by
        T steps (old state buffers are donated).
        """
        ic = jnp.asarray(input_currents, jnp.float32)
        if ic.ndim == 2:
            ic = ic[None]
        T = ic.shape[0]
        pad = self.Np - self.N
        if pad:
            ic = jnp.pad(ic, ((0, 0), (0, 0), (0, pad)))
        coeffs = jnp.asarray(coeffs, jnp.float32).reshape((3,))
        times = jnp.asarray(times, jnp.float32).reshape((T,))

        fired, self.v, self.u, self.last_spike_time = _izhikevich_call(
            coeffs, times, ic, self.v, self.u, self.a, self.b, self.c,
            self.d, self.bias, self.last_spike_time, tn=self.tn)
        return fired[..., :self.N] if pad else fired

    def forward(self, input_current, t, coeffs):
        """Single-step API matching the PyTorch module (returns (B, N) fired)."""
        fired = self.run(jnp.asarray(input_current, jnp.float32)[None],
                         jnp.asarray(t, jnp.float32).reshape((1,)),
                         coeffs)
        return fired[0]


# ----------------------------------------------------------------------------
# Pure-JAX reference (literal transcription of the PyTorch forward).
# ----------------------------------------------------------------------------
def _reference_step(ic, t, coeffs, v, u, a, b, c, d, bias, lst):
    v_sq = v ** 2
    terms = jnp.stack([v_sq, v, jnp.ones_like(v)], axis=-1)
    dv = jnp.einsum('bni,i->bn', terms, coeffs,
                    precision=jax.lax.Precision.HIGHEST) - u + ic + bias
    du = a * (b * v - u)
    v_new = v + dv
    u_new = u + du
    fired = (v_new > THRESHOLD).astype(jnp.float32)
    spike = fired > 0.5
    v_post = jnp.where(spike, c, v_new)
    u_post = jnp.where(spike, u_new + d, u_new)
    lst_new = jnp.where(spike, jnp.float32(t), lst)
    return fired, v_post, u_post, lst_new, v_new


if __name__ == "__main__":
    B, N, T = 8, 300, 6   # N deliberately not a multiple of 128 (exercises padding)
    key = jax.random.PRNGKey(0)

    layer = IzhikevichLayer(num_neurons=N, batch_size=B)
    layer.reset()

    ics = jax.random.uniform(key, (T, B, N), dtype=jnp.float32,
                             minval=-10.0, maxval=10.0)
    coeffs = jnp.array([0.04, 5.0, 140.0], dtype=jnp.float32)  # classic Izhikevich
    times = jnp.arange(1, T + 1, dtype=jnp.float32)

    fired = layer.run(ics, times, coeffs)
    jax.block_until_ready((fired, layer.v, layer.u, layer.last_spike_time))
    assert fired.shape == (T, B, N)

    # ---- reference simulation on the unpadded state ------------------------
    shape = (B, N)
    a = jnp.full(shape, 0.02, jnp.float32)
    b = jnp.full(shape, 0.2, jnp.float32)
    c = jnp.full(shape, -65.0, jnp.float32)
    d = jnp.full(shape, 8.0, jnp.float32)
    bias = jnp.full(shape, 98.0, jnp.float32)
    v_ref = jnp.full(shape, -65.0, jnp.float32)
    u_ref = b * v_ref
    lst_ref = jnp.full(shape, -jnp.inf, jnp.float32)

    # Tolerance-aware comparison: `fired` / state are only checked for neurons
    # whose reference membrane potential never came within 1e-2 of the 30.0
    # threshold (polynomial reassociation in the kernel can flip ulp-level
    # threshold ties; such flips then change the whole trajectory).
    trusted = jnp.ones(shape, dtype=bool)
    for s in range(T):
        f_ref, v_ref, u_ref, lst_ref, v_pre = _reference_step(
            ics[s], times[s], coeffs, v_ref, u_ref, a, b, c, d, bias, lst_ref)
        safe = jnp.abs(v_pre - THRESHOLD) > 1e-2
        chk = trusted & safe
        assert bool(jnp.all(jnp.where(chk, fired[s] == f_ref, True))), \
            f"fired mismatch at step {s}"
        trusted = chk

    frac_trusted = float(jnp.mean(trusted.astype(jnp.float32)))
    assert frac_trusted > 0.9, f"too few threshold-safe neurons: {frac_trusted}"
    assert bool(jnp.all(jnp.where(
        trusted, jnp.abs(layer.v[:, :N] - v_ref) < 1e-2, True))), "v mismatch"
    assert bool(jnp.all(jnp.where(
        trusted, jnp.abs(layer.u[:, :N] - u_ref) < 1e-2, True))), "u mismatch"
    assert bool(jnp.all(jnp.where(
        trusted, layer.last_spike_time[:, :N] == lst_ref, True))), "lst mismatch"

    # Single-step API parity (shape check; advances the state one more step).
    f1 = layer.forward(ics[0], float(T + 1), coeffs)
    jax.block_until_ready(f1)
    assert f1.shape == (B, N)

    print("KERNEL_OK")
</pallas_src>

<mosaic_0001>
module attributes {stable_mosaic.version = 11 : i64} {
  func.func @izhikevich_kernel(%arg0: i32, %arg1: i32, %arg2: memref<3xf32, #tpu.memory_space<smem>>, %arg3: memref<6xf32, #tpu.memory_space<smem>>, %arg4: memref<1x8x384xf32, #tpu.memory_space<vmem>>, %arg5: memref<8x384xf32, #tpu.memory_space<vmem>>, %arg6: memref<8x384xf32, #tpu.memory_space<vmem>>, %arg7: memref<8x384xf32, #tpu.memory_space<vmem>>, %arg8: memref<8x384xf32, #tpu.memory_space<vmem>>, %arg9: memref<8x384xf32, #tpu.memory_space<vmem>>, %arg10: memref<8x384xf32, #tpu.memory_space<vmem>>, %arg11: memref<8x384xf32, #tpu.memory_space<vmem>>, %arg12: memref<8x384xf32, #tpu.memory_space<vmem>>, %arg13: memref<1x8x384xf32, #tpu.memory_space<vmem>>, %arg14: memref<8x384xf32, #tpu.memory_space<vmem>>, %arg15: memref<8x384xf32, #tpu.memory_space<vmem>>, %arg16: memref<8x384xf32, #tpu.memory_space<vmem>>) attributes {dimension_semantics = [#tpu.dimension_semantics<parallel>, #tpu.dimension_semantics<arbitrary>], iteration_bounds = array<i64: 1, 6>, scalar_prefetch = 0 : i64, scratch_operands = 0 : i64, tpu.core_type = #tpu.core_type<tc>, window_params = [{transform_indices = @transform_0, window_bounds = array<i64: 3>}, {transform_indices = @transform_1, window_bounds = array<i64: 6>}, {transform_indices = @transform_2, window_bounds = array<i64: 1, 8, 384>}, {transform_indices = @transform_3, window_bounds = array<i64: 8, 384>}, {transform_indices = @transform_4, window_bounds = array<i64: 8, 384>}, {transform_indices = @transform_5, window_bounds = array<i64: 8, 384>}, {transform_indices = @transform_6, window_bounds = array<i64: 8, 384>}, {transform_indices = @transform_7, window_bounds = array<i64: 8, 384>}, {transform_indices = @transform_8, window_bounds = array<i64: 8, 384>}, {transform_indices = @transform_9, window_bounds = array<i64: 8, 384>}, {transform_indices = @transform_10, window_bounds = array<i64: 8, 384>}, {transform_indices = @transform_11, window_bounds = array<i64: 1, 8, 384>}, {transform_indices = @transform_12, window_bounds = array<i64: 8, 384>}, {transform_indices = @transform_13, window_bounds = array<i64: 8, 384>}, {transform_indices = @transform_14, window_bounds = array<i64: 8, 384>}]} {
    %c0_i32 = arith.constant 0 : i32
    %0 = arith.cmpi eq, %arg1, %c0_i32 : i32
    %1 = arith.extui %0 : i1 to i32
    %c0_i32_0 = arith.constant 0 : i32
    %2 = arith.cmpi ne, %1, %c0_i32_0 : i32
    scf.if %2 {
      %c0_29 = arith.constant 0 : index
      %c0_30 = arith.constant 0 : index
      %48 = vector.load %arg5[%c0_29, %c0_30] : memref<8x384xf32, #tpu.memory_space<vmem>>, vector<8x384xf32>
      %c0_31 = arith.constant 0 : index
      %c0_32 = arith.constant 0 : index
      %49 = vector.load %arg14[%c0_31, %c0_32] : memref<8x384xf32, #tpu.memory_space<vmem>>, vector<8x384xf32>
      tpu.vector_store %arg14[%c0_31, %c0_32], %48 {strides = array<i32>} : memref<8x384xf32, #tpu.memory_space<vmem>>, vector<8x384xf32>,
      %c0_33 = arith.constant 0 : index
      %c0_34 = arith.constant 0 : index
      %50 = vector.load %arg6[%c0_33, %c0_34] : memref<8x384xf32, #tpu.memory_space<vmem>>, vector<8x384xf32>
      %c0_35 = arith.constant 0 : index
      %c0_36 = arith.constant 0 : index
      %51 = vector.load %arg15[%c0_35, %c0_36] : memref<8x384xf32, #tpu.memory_space<vmem>>, vector<8x384xf32>
      tpu.vector_store %arg15[%c0_35, %c0_36], %50 {strides = array<i32>} : memref<8x384xf32, #tpu.memory_space<vmem>>, vector<8x384xf32>,
      %c0_37 = arith.constant 0 : index
      %c0_38 = arith.constant 0 : index
      %52 = vector.load %arg12[%c0_37, %c0_38] : memref<8x384xf32, #tpu.memory_space<vmem>>, vector<8x384xf32>
      %c0_39 = arith.constant 0 : index
      %c0_40 = arith.constant 0 : index
      %53 = vector.load %arg16[%c0_39, %c0_40] : memref<8x384xf32, #tpu.memory_space<vmem>>, vector<8x384xf32>
      tpu.vector_store %arg16[%c0_39, %c0_40], %52 {strides = array<i32>} : memref<8x384xf32, #tpu.memory_space<vmem>>, vector<8x384xf32>,
    } else {
    }
    %c0 = arith.constant 0 : index
    %c0_1 = arith.constant 0 : index
    %3 = vector.load %arg14[%c0, %c0_1] : memref<8x384xf32, #tpu.memory_space<vmem>>, vector<8x384xf32>
    %c0_2 = arith.constant 0 : index
    %c0_3 = arith.constant 0 : index
    %4 = vector.load %arg15[%c0_2, %c0_3] : memref<8x384xf32, #tpu.memory_space<vmem>>, vector<8x384xf32>
    %c0_4 = arith.constant 0 : index
    %5 = memref.load %arg2[%c0_4] : memref<3xf32, #tpu.memory_space<smem>>
    %c1 = arith.constant 1 : index
    %6 = memref.load %arg2[%c1] : memref<3xf32, #tpu.memory_space<smem>>
    %c2 = arith.constant 2 : index
    %7 = memref.load %arg2[%c2] : memref<3xf32, #tpu.memory_space<smem>>
    %8 = arith.index_cast %arg1 : i32 to index
    %9 = memref.load %arg3[%8] : memref<6xf32, #tpu.memory_space<smem>>
    %10 = vector.broadcast %5 : f32 to vector<8x384xf32>
    %11 = arith.mulf %10, %3 : vector<8x384xf32>
    %12 = vector.broadcast %6 : f32 to vector<8x384xf32>
    %13 = arith.addf %11, %12 : vector<8x384xf32>
    %14 = arith.mulf %3, %13 : vector<8x384xf32>
    %15 = vector.broadcast %7 : f32 to vector<8x384xf32>
    %16 = arith.addf %14, %15 : vector<8x384xf32>
    %17 = arith.subf %16, %4 : vector<8x384xf32>
    %c0_5 = arith.constant 0 : index
    %c0_6 = arith.constant 0 : index
    %c0_7 = arith.constant 0 : index
    %18 = vector.load %arg4[%c0_5, %c0_6, %c0_7] : memref<1x8x384xf32, #tpu.memory_space<vmem>>, vector<1x8x384xf32>
    %19 = vector.shape_cast %18 : vector<1x8x384xf32> to vector<8x384xf32>
    %20 = arith.addf %17, %19 : vector<8x384xf32>
    %c0_8 = arith.constant 0 : index
    %c0_9 = arith.constant 0 : index
    %21 = vector.load %arg11[%c0_8, %c0_9] : memref<8x384xf32, #tpu.memory_space<vmem>>, vector<8x384xf32>
    %22 = arith.addf %20, %21 : vector<8x384xf32>
    %c0_10 = arith.constant 0 : index
    %c0_11 = arith.constant 0 : index
    %23 = vector.load %arg7[%c0_10, %c0_11] : memref<8x384xf32, #tpu.memory_space<vmem>>, vector<8x384xf32>
    %c0_12 = arith.constant 0 : index
    %c0_13 = arith.constant 0 : index
    %24 = vector.load %arg8[%c0_12, %c0_13] : memref<8x384xf32, #tpu.memory_space<vmem>>, vector<8x384xf32>
    %25 = arith.mulf %24, %3 : vector<8x384xf32>
    %26 = arith.subf %25, %4 : vector<8x384xf32>
    %27 = arith.mulf %23, %26 : vector<8x384xf32>
    %28 = arith.addf %3, %22 : vector<8x384xf32>
    %29 = arith.addf %4, %27 : vector<8x384xf32>
    %cst = arith.constant 3.000000e+01 : f32
    %30 = vector.broadcast %cst : f32 to vector<8x384xf32>
    %31 = arith.cmpf ogt, %28, %30 : vector<8x384xf32>
    %32 = arith.extui %31 : vector<8x384xi1> to vector<8x384xi32>
    %33 = arith.sitofp %32 : vector<8x384xi32> to vector<8x384xf32>
    %c0_14 = arith.constant 0 : index
    %c0_15 = arith.constant 0 : index
    %c0_16 = arith.constant 0 : index
    %34 = vector.load %arg13[%c0_14, %c0_15, %c0_16] : memref<1x8x384xf32, #tpu.memory_space<vmem>>, vector<1x8x384xf32>
    %35 = vector.shape_cast %34 : vector<1x8x384xf32> to vector<8x384xf32>
    %36 = vector.shape_cast %33 : vector<8x384xf32> to vector<1x8x384xf32>
    tpu.vector_store %arg13[%c0_14, %c0_15, %c0_16], %36 {strides = array<i32>} : memref<1x8x384xf32, #tpu.memory_space<vmem>>, vector<1x8x384xf32>,
    %c0_17 = arith.constant 0 : index
    %c0_18 = arith.constant 0 : index
    %37 = vector.load %arg9[%c0_17, %c0_18] : memref<8x384xf32, #tpu.memory_space<vmem>>, vector<8x384xf32>
    %38 = arith.select %31, %37, %28 : vector<8x384xi1>, vector<8x384xf32>
    %c0_19 = arith.constant 0 : index
    %c0_20 = arith.constant 0 : index
    %39 = vector.load %arg14[%c0_19, %c0_20] : memref<8x384xf32, #tpu.memory_space<vmem>>, vector<8x384xf32>
    tpu.vector_store %arg14[%c0_19, %c0_20], %38 {strides = array<i32>} : memref<8x384xf32, #tpu.memory_space<vmem>>, vector<8x384xf32>,
    %c0_21 = arith.constant 0 : index
    %c0_22 = arith.constant 0 : index
    %40 = vector.load %arg10[%c0_21, %c0_22] : memref<8x384xf32, #tpu.memory_space<vmem>>, vector<8x384xf32>
    %41 = arith.addf %29, %40 : vector<8x384xf32>
    %42 = arith.select %31, %41, %29 : vector<8x384xi1>, vector<8x384xf32>
    %c0_23 = arith.constant 0 : index
    %c0_24 = arith.constant 0 : index
    %43 = vector.load %arg15[%c0_23, %c0_24] : memref<8x384xf32, #tpu.memory_space<vmem>>, vector<8x384xf32>
    tpu.vector_store %arg15[%c0_23, %c0_24], %42 {strides = array<i32>} : memref<8x384xf32, #tpu.memory_space<vmem>>, vector<8x384xf32>,
    %c0_25 = arith.constant 0 : index
    %c0_26 = arith.constant 0 : index
    %44 = vector.load %arg16[%c0_25, %c0_26] : memref<8x384xf32, #tpu.memory_space<vmem>>, vector<8x384xf32>
    %45 = vector.broadcast %9 : f32 to vector<8x384xf32>
    %46 = arith.select %31, %45, %44 : vector<8x384xi1>, vector<8x384xf32>
    %c0_27 = arith.constant 0 : index
    %c0_28 = arith.constant 0 : index
    %47 = vector.load %arg16[%c0_27, %c0_28] : memref<8x384xf32, #tpu.memory_space<vmem>>, vector<8x384xf32>
    tpu.vector_store %arg16[%c0_27, %c0_28], %46 {strides = array<i32>} : memref<8x384xf32, #tpu.memory_space<vmem>>, vector<8x384xf32>,
    return
  }
  func.func @transform_0(%arg0: i32, %arg1: i32) -> i32 {
    %c0_i32 = arith.constant 0 : i32
    %c0_i32_0 = arith.constant 0 : i32
    return %c0_i32 : i32
  }
  func.func @transform_1(%arg0: i32, %arg1: i32) -> i32 {
    %c0_i32 = arith.constant 0 : i32
    %c0_i32_0 = arith.constant 0 : i32
    return %c0_i32 : i32
  }
  func.func @transform_2(%arg0: i32, %arg1: i32) -> (i32, i32, i32) {
    %c0_i32 = arith.constant 0 : i32
    %c0_i32_0 = arith.constant 0 : i32
    return %arg1, %c0_i32, %arg0 : i32, i32, i32
  }
  func.func @transform_3(%arg0: i32, %arg1: i32) -> (i32, i32) {
    %c0_i32 = arith.constant 0 : i32
    %c0_i32_0 = arith.constant 0 : i32
    return %c0_i32, %arg0 : i32, i32
  }
  func.func @transform_4(%arg0: i32, %arg1: i32) -> (i32, i32) {
    %c0_i32 = arith.constant 0 : i32
    %c0_i32_0 = arith.constant 0 : i32
    return %c0_i32, %arg0 : i32, i32
  }
  func.func @transform_5(%arg0: i32, %arg1: i32) -> (i32, i32) {
    %c0_i32 = arith.constant 0 : i32
    %c0_i32_0 = arith.constant 0 : i32
    return %c0_i32, %arg0 : i32, i32
  }
  func.func @transform_6(%arg0: i32, %arg1: i32) -> (i32, i32) {
    %c0_i32 = arith.constant 0 : i32
    %c0_i32_0 = arith.constant 0 : i32
    return %c0_i32, %arg0 : i32, i32
  }
  func.func @transform_7(%arg0: i32, %arg1: i32) -> (i32, i32) {
    %c0_i32 = arith.constant 0 : i32
    %c0_i32_0 = arith.constant 0 : i32
    return %c0_i32, %arg0 : i32, i32
  }
  func.func @transform_8(%arg0: i32, %arg1: i32) -> (i32, i32) {
    %c0_i32 = arith.constant 0 : i32
    %c0_i32_0 = arith.constant 0 : i32
    return %c0_i32, %arg0 : i32, i32
  }
  func.func @transform_9(%arg0: i32, %arg1: i32) -> (i32, i32) {
    %c0_i32 = arith.constant 0 : i32
    %c0_i32_0 = arith.constant 0 : i32
    return %c0_i32, %arg0 : i32, i32
  }
  func.func @transform_10(%arg0: i32, %arg1: i32) -> (i32, i32) {
    %c0_i32 = arith.constant 0 : i32
    %c0_i32_0 = arith.constant 0 : i32
    return %c0_i32, %arg0 : i32, i32
  }
  func.func @transform_11(%arg0: i32, %arg1: i32) -> (i32, i32, i32) {
    %c0_i32 = arith.constant 0 : i32
    %c0_i32_0 = arith.constant 0 : i32
    return %arg1, %c0_i32, %arg0 : i32, i32, i32
  }
  func.func @transform_12(%arg0: i32, %arg1: i32) -> (i32, i32) {
    %c0_i32 = arith.constant 0 : i32
    %c0_i32_0 = arith.constant 0 : i32
    return %c0_i32, %arg0 : i32, i32
  }
  func.func @transform_13(%arg0: i32, %arg1: i32) -> (i32, i32) {
    %c0_i32 = arith.constant 0 : i32
    %c0_i32_0 = arith.constant 0 : i32
    return %c0_i32, %arg0 : i32, i32
  }
  func.func @transform_14(%arg0: i32, %arg1: i32) -> (i32, i32) {
    %c0_i32 = arith.constant 0 : i32
    %c0_i32_0 = arith.constant 0 : i32
    return %c0_i32, %arg0 : i32, i32
  }
}

</mosaic_0001>

<llo_original>
// kernel: _izhikevich_call.1
$region0: #{_izhikevich_call.1}
  #allocation0 [shape = 'u32[]', space=smem, size = 0x4, offset = 0x4, fixed_abs, tag = 'smem constant byte address 0x4 - core index']
  #allocation1 [shape = 'u32[144,128]{1,0:T(1,128)}', space=vmem, size = 0x12000, scoped, tag = 'internal scratch']
  %s0 = inlined_call_operand.hbm [shape: f32[3], index: 0, kind: input, shape index: {}]
  %s1 = inlined_call_operand.vmem [shape: f32[6], index: 1, kind: input, shape index: {}]
  %s2 = inlined_call_operand.hbm [shape: f32[6,8,384], index: 2, kind: input, shape index: {}]
  %s3 = inlined_call_operand.hbm [shape: f32[8,384], index: 3, kind: input, shape index: {}, may-alias: {3,12}]
  %s4 = inlined_call_operand.hbm [shape: f32[8,384], index: 4, kind: input, shape index: {}, may-alias: {4,13}]
  %s5 = inlined_call_operand.hbm [shape: f32[8,384], index: 5, kind: input, shape index: {}]
  %s6 = inlined_call_operand.hbm [shape: f32[8,384], index: 6, kind: input, shape index: {}]
  %s7 = inlined_call_operand.hbm [shape: f32[8,384], index: 7, kind: input, shape index: {}]
  %s8 = inlined_call_operand.hbm [shape: f32[8,384], index: 8, kind: input, shape index: {}]
  %s9 = inlined_call_operand.hbm [shape: f32[8,384], index: 9, kind: input, shape index: {}]
  %s10 = inlined_call_operand.hbm [shape: f32[8,384], index: 10, kind: input, shape index: {}, may-alias: {10,14}]
  %s11 = inlined_call_operand.hbm [shape: f32[6,8,384], index: 11, kind: output, shape index: {0}]
  %s12 = inlined_call_operand.hbm [shape: f32[8,384], index: 12, kind: output, shape index: {1}, may-alias: {3,12}]
  %s13 = inlined_call_operand.hbm [shape: f32[8,384], index: 13, kind: output, shape index: {2}, may-alias: {4,13}]
  %s14 = inlined_call_operand.hbm [shape: f32[8,384], index: 14, kind: output, shape index: {3}, may-alias: {10,14}]
  %15 = xla_tuple %s11, %s12, %s13, %s14
  %s16 = sld [smem:[#allocation0]]
  $region149: #{_izhikevich_call.1} parent=0
    _
  %s18 = ssub.s32 1, %s16
  %s19 = scalar_select 0, %s18, %s16
  $region1: #{_izhikevich_call.1} parent=0
    #allocation2 [shape = 'u8[512]{0}', space=smem, size = 0x200, scoped, tag = 'input window, operand 0, single buffered']
    #allocation3 [shape = 's32[2]{0}', space=sflag, size = 0x8, scoped, tag = 'scoped memory for _izhikevich_call.1']
    #allocation4 [shape = 's32[2]{0}', space=sflag, size = 0x8, scoped, tag = 'scoped memory for _izhikevich_call.1']
    #allocation5 [shape = 's32[2]{0}', space=sflag, size = 0x8, scoped, tag = 'scoped memory for _izhikevich_call.1']
    #allocation6 [shape = 's32[2]{0}', space=sflag, size = 0x8, scoped, tag = 'scoped memory for _izhikevich_call.1']
    #allocation7 [shape = 'u8[512]{0}', space=smem, size = 0x200, scoped, tag = 'input window, operand 1, single buffered']
    #allocation8 [shape = 'u8[24576]{0}', space=vmem, size = 0x6000, scoped, tag = 'input window, operand 2']
    #allocation9 [shape = 'u8[12288]{0}', space=vmem, size = 0x3000, scoped, tag = 'input window, operand 3, single buffered']
    #allocation10 [shape = 's32[1]{0}', space=sflag, size = 0x4, scoped, tag = 'scoped memory for _izhikevich_call.1']
    #allocation11 [shape = 'u8[12288]{0}', space=vmem, size = 0x3000, scoped, tag = 'input window, operand 4, single buffered']
    #allocation12 [shape = 'u8[12288]{0}', space=vmem, size = 0x3000, scoped, tag = 'input window, operand 5, single buffered']
    #allocation13 [shape = 's32[1]{0}', space=sflag, size = 0x4, scoped, tag = 'scoped memory for _izhikevich_call.1']
    #allocation14 [shape = 'u8[12288]{0}', space=vmem, size = 0x3000, scoped, tag = 'input window, operand 6, single buffered']
    #allocation15 [shape = 'u8[12288]{0}', space=vmem, size = 0x3000, scoped, tag = 'input window, operand 7, single buffered']
    #allocation16 [shape = 's32[1]{0}', space=sflag, size = 0x4, scoped, tag = 'scoped memory for _izhikevich_call.1']
    #allocation17 [shape = 'u8[12288]{0}', space=vmem, size = 0x3000, scoped, tag = 'input window, operand 8, single buffered']
    #allocation18 [shape = 'u8[12288]{0}', space=vmem, size = 0x3000, scoped, tag = 'input window, operand 9, single buffered']
    #allocation19 [shape = 's32[1]{0}', space=sflag, size = 0x4, scoped, tag = 'scoped memory for _izhikevich_call.1']
    #allocation20 [shape = 'u8[12288]{0}', space=vmem, size = 0x3000, scoped, tag = 'input window, operand 10, single buffered']
    #allocation21 [shape = 'u8[24576]{0}', space=vmem, size = 0x6000, scoped, tag = 'output window, operand 0']
    #allocation22 [shape = 'u8[12288]{0}', space=vmem, size = 0x3000, scoped, tag = 'output window, operand 1, single buffered']
    #allocation23 [shape = 's32[1]{0}', space=sflag, size = 0x4, scoped, tag = 'scoped memory for _izhikevich_call.1']
    #allocation24 [shape = 'u8[12288]{0}', space=vmem, size = 0x3000, scoped, tag = 'output window, operand 2, single buffered']
    #allocation25 [shape = 'u8[12288]{0}', space=vmem, size = 0x3000, scoped, tag = 'output window, operand 3, single buffered']
    #allocation26 [shape = 's32[1]{0}', space=sflag, size = 0x4, scoped, tag = 'scoped memory for _izhikevich_call.1']
    %20 = vsyncpa [#allocation5], 0
    %21 = vsyncpa [#allocation6], 0
    %22 = vsyncpa [#allocation3], 0
    %s23 = scalar_lea.sflag [#allocation3], 1
    %24 = vsyncpa %s23, 0
    %25 = vsyncpa [#allocation10], 0
    %26 = vsyncpa [#allocation13], 0
    %27 = vsyncpa [#allocation16], 0
    %28 = vsyncpa [#allocation19], 0
    %29 = vsyncpa [#allocation4], 0
    %s30 = scalar_lea.sflag [#allocation4], 1
    %31 = vsyncpa %s30, 0
    %32 = vsyncpa [#allocation23], 0
    %33 = vsyncpa [#allocation26], 0
    loop: start=0, step=1, limit=8
    $region2: #{_izhikevich_call.1} parent=1 // loop_pre_header
      _
    $region3: #{_izhikevich_call.1} parent=1 // loop_header
      %s35 = sphi 0, %s39
      %p36 = scmp.ge.s32.totalorder %s35, 8
      %s42 = sphi 0, %s54
      %s43 = sphi 0, %s50
      %s44 = sphi 0, %s42
      %s45 = sphi 0, %s43
      %s46 = sphi 0, %s44
      %s47 = sphi 0, %s45
      %s55 = sphi 0, %s55
      %s57 = sphi 0, %s55
      %s58 = sphi 0, %s57
      %s72 = sphi 0, %s58
      %s76 = sphi 0, %s76
      %s78 = sphi 0, %s76
      %s79 = sphi 0, %s78
      %s93 = sphi 0, %s79
      %s101 = sphi 0, %s103
      %s104 = sphi 0, %s101
      %s105 = sphi 0, %s104
      %s121 = sphi 0, %s105
      %s127 = sphi 0, %s129
      %s130 = sphi 0, %s127
      %s131 = sphi 0, %s130
      %s147 = sphi 0, %s131
      %s153 = sphi 0, %s155
      %s156 = sphi 0, %s153
      %s157 = sphi 0, %s156
      %s173 = sphi 0, %s157
      %s179 = sphi 0, %s181
      %s182 = sphi 0, %s179
      %s183 = sphi 0, %s182
      %s199 = sphi 0, %s183
      %s205 = sphi 0, %s207
      %s208 = sphi 0, %s205
      %s209 = sphi 0, %s208
      %s225 = sphi 0, %s209
      %s231 = sphi 0, %s233
      %s234 = sphi 0, %s231
      %s235 = sphi 0, %s234
      %s251 = sphi 0, %s235
      %s257 = sphi 0, %s259
      %s260 = sphi 0, %s257
      %s261 = sphi 0, %s260
      %s277 = sphi 0, %s261
      %s283 = sphi 0, %s285
      %s286 = sphi 0, %s283
      %s287 = sphi 0, %s286
      %s303 = sphi 0, %s287
      %s309 = sphi 0, %s311
      %s312 = sphi 0, %s309
      %s313 = sphi 0, %s312
      %s329 = sphi 0, %s313
      %s337 = sphi 0, %s339
      %s340 = sphi 0, %s337
      %s341 = sphi 0, %s340
      %s357 = sphi 0, %s341
      %s363 = sphi 0, %s365
      %s366 = sphi 0, %s363
      %s367 = sphi 0, %s366
      %s383 = sphi 0, %s367
      %s389 = sphi 0, %s391
      %s392 = sphi 0, %s389
      %s393 = sphi 0, %s392
      %s409 = sphi 0, %s393
      %s415 = sphi 0, %s417
      %s418 = sphi 0, %s415
      %s419 = sphi 0, %s418
      %s435 = sphi 0, %s419
    $region4: #{_izhikevich_call.1} parent=1 // loop_header_branch
      %38 = sbr.rel (%p36) target = $region8
    $region5: #{_izhikevich_call.1} parent=1 // loop_body
      %s40 = ssub.s32 %s35, 1
      %s41 = ssub.s32 %s35, 2
      %s48 = sadd.s32 1, %s43
      %p49 = scmp.ge.s32.totalorder %s48, 6
      %s50 = scalar_select %p49, 0, %s48
      %s51 = sadd.s32 1, %s42
      %s52 = scalar_select %p49, %s51, %s42
      %p53 = scmp.ge.s32.totalorder %s52, 1
      %s54 = scalar_select %p53, 0, %s52
      %s56 = sadd.s32 %s55, 1
      %p59 = scmp.eq.s32.totalorder %s35, 5
      %p60 = scmp.ne.s32.totalorder %s55, %s57
      %p61 = scmp.eq.s32.totalorder %s35, 0
      %p62 = por %p60, %p61
      %p63 = scmp.ne.s32.totalorder %s55, %s57
      %p64 = scmp.eq.s32.totalorder %s40, 5
      %p65 = por %p63, %p64
      %p66 = scmp.ne.s32.totalorder %s57, %s58
      %p67 = scmp.eq.s32.totalorder %s40, 0
      %p68 = por %p66, %p67
      %p69 = scmp.ne.s32.totalorder %s57, %s58
      %p70 = scmp.eq.s32.totalorder %s41, 5
      %p71 = por %p69, %p70
      %p73 = scmp.ne.s32.totalorder %s58, %s72
      %p74 = scmp.eq.s32.totalorder %s41, 0
      %p75 = por %p73, %p74
      %s77 = sadd.s32 %s76, 1
      %p80 = scmp.eq.s32.totalorder %s35, 5
      %p81 = scmp.ne.s32.totalorder %s76, %s78
      %p82 = scmp.eq.s32.totalorder %s35, 0
      %p83 = por %p81, %p82
      %p84 = scmp.ne.s32.totalorder %s76, %s78
      %p85 = scmp.eq.s32.totalorder %s40, 5
      %p86 = por %p84, %p85
      %p87 = scmp.ne.s32.totalorder %s78, %s79
      %p88 = scmp.eq.s32.totalorder %s40, 0
      %p89 = por %p87, %p88
      %p90 = scmp.ne.s32.totalorder %s78, %s79
      %p91 = scmp.eq.s32.totalorder %s41, 5
      %p92 = por %p90, %p91
      %p94 = scmp.ne.s32.totalorder %s79, %s93
      %p95 = scmp.eq.s32.totalorder %s41, 0
      %p96 = por %p94, %p95
      %s97 = ssub.s32 %s43, %s50
      %s98 = ssub.s32 %s42, %s54
      %s99 = sor.u32 %s97, %s98
      %p100 = scmp.eq.s32.totalorder %s99, 0
      %s102 = sadd.s32 %s101, 1
      %s103 = scalar_select %p100, %s101, %s102
      %p106 = pneg %p100
      %p107 = scmp.eq.s32.totalorder %s35, 5
      %p108 = por %p106, %p107
      %p109 = scmp.ne.s32.totalorder %s101, %s104
      %p110 = scmp.eq.s32.totalorder %s35, 0
      %p111 = por %p109, %p110
      %p112 = scmp.ne.s32.totalorder %s101, %s104
      %p113 = scmp.eq.s32.totalorder %s40, 5
      %p114 = por %p112, %p113
      %p115 = scmp.ne.s32.totalorder %s104, %s105
      %p116 = scmp.eq.s32.totalorder %s40, 0
      %p117 = por %p115, %p116
      %p118 = scmp.ne.s32.totalorder %s104, %s105
      %p119 = scmp.eq.s32.totalorder %s41, 5
      %p120 = por %p118, %p119
      %p122 = scmp.ne.s32.totalorder %s105, %s121
      %p123 = scmp.eq.s32.totalorder %s41, 0
      %p124 = por %p122, %p123
      %s125 = ssub.s32 %s42, %s54
      %p126 = scmp.eq.s32.totalorder %s125, 0
      %s128 = sadd.s32 %s127, 1
      %s129 = scalar_select %p126, %s127, %s128
      %p132 = pneg %p126
      %p133 = scmp.eq.s32.totalorder %s35, 5
      %p134 = por %p132, %p133
      %p135 = scmp.ne.s32.totalorder %s127, %s130
      %p136 = scmp.eq.s32.totalorder %s35, 0
      %p137 = por %p135, %p136
      %p138 = scmp.ne.s32.totalorder %s127, %s130
      %p139 = scmp.eq.s32.totalorder %s40, 5
      %p140 = por %p138, %p139
      %p141 = scmp.ne.s32.totalorder %s130, %s131
      %p142 = scmp.eq.s32.totalorder %s40, 0
      %p143 = por %p141, %p142
      %p144 = scmp.ne.s32.totalorder %s130, %s131
      %p145 = scmp.eq.s32.totalorder %s41, 5
      %p146 = por %p144, %p145
      %p148 = scmp.ne.s32.totalorder %s131, %s147
      %p149 = scmp.eq.s32.totalorder %s41, 0
      %p150 = por %p148, %p149
      %s151 = ssub.s32 %s42, %s54
      %p152 = scmp.eq.s32.totalorder %s151, 0
      %s154 = sadd.s32 %s153, 1
      %s155 = scalar_select %p152, %s153, %s154
      %p158 = pneg %p152
      %p159 = scmp.eq.s32.totalorder %s35, 5
      %p160 = por %p158, %p159
      %p161 = scmp.ne.s32.totalorder %s153, %s156
      %p162 = scmp.eq.s32.totalorder %s35, 0
      %p163 = por %p161, %p162
      %p164 = scmp.ne.s32.totalorder %s153, %s156
      %p165 = scmp.eq.s32.totalorder %s40, 5
      %p166 = por %p164, %p165
      %p167 = scmp.ne.s32.totalorder %s156, %s157
      %p168 = scmp.eq.s32.totalorder %s40, 0
      %p169 = por %p167, %p168
      %p170 = scmp.ne.s32.totalorder %s156, %s157
      %p171 = scmp.eq.s32.totalorder %s41, 5
      %p172 = por %p170, %p171
      %p174 = scmp.ne.s32.totalorder %s157, %s173
      %p175 = scmp.eq.s32.totalorder %s41, 0
      %p176 = por %p174, %p175
      %s177 = ssub.s32 %s42, %s54
      %p178 = scmp.eq.s32.totalorder %s177, 0
      %s180 = sadd.s32 %s179, 1
      %s181 = scalar_select %p178, %s179, %s180
      %p184 = pneg %p178
      %p185 = scmp.eq.s32.totalorder %s35, 5
      %p186 = por %p184, %p185
      %p187 = scmp.ne.s32.totalorder %s179, %s182
      %p188 = scmp.eq.s32.totalorder %s35, 0
      %p189 = por %p187, %p188
      %p190 = scmp.ne.s32.totalorder %s179, %s182
      %p191 = scmp.eq.s32.totalorder %s40, 5
      %p192 = por %p190, %p191
      %p193 = scmp.ne.s32.totalorder %s182, %s183
      %p194 = scmp.eq.s32.totalorder %s40, 0
      %p195 = por %p193, %p194
      %p196 = scmp.ne.s32.totalorder %s182, %s183
      %p197 = scmp.eq.s32.totalorder %s41, 5
      %p198 = por %p196, %p197
      %p200 = scmp.ne.s32.totalorder %s183, %s199
      %p201 = scmp.eq.s32.totalorder %s41, 0
      %p202 = por %p200, %p201
      %s203 = ssub.s32 %s42, %s54
      %p204 = scmp.eq.s32.totalorder %s203, 0
      %s206 = sadd.s32 %s205, 1
      %s207 = scalar_select %p204, %s205, %s206
      %p210 = pneg %p204
      %p211 = scmp.eq.s32.totalorder %s35, 5
      %p212 = por %p210, %p211
      %p213 = scmp.ne.s32.totalorder %s205, %s208
      %p214 = scmp.eq.s32.totalorder %s35, 0
      %p215 = por %p213, %p214
      %p216 = scmp.ne.s32.totalorder %s205, %s208
      %p217 = scmp.eq.s32.totalorder %s40, 5
      %p218 = por %p216, %p217
      %p219 = scmp.ne.s32.totalorder %s208, %s209
      %p220 = scmp.eq.s32.totalorder %s40, 0
      %p221 = por %p219, %p220
      %p222 = scmp.ne.s32.totalorder %s208, %s209
      %p223 = scmp.eq.s32.totalorder %s41, 5
      %p224 = por %p222, %p223
      %p226 = scmp.ne.s32.totalorder %s209, %s225
      %p227 = scmp.eq.s32.totalorder %s41, 0
      %p228 = por %p226, %p227
      %s229 = ssub.s32 %s42, %s54
      %p230 = scmp.eq.s32.totalorder %s229, 0
      %s232 = sadd.s32 %s231, 1
      %s233 = scalar_select %p230, %s231, %s232
      %p236 = pneg %p230
      %p237 = scmp.eq.s32.totalorder %s35, 5
      %p238 = por %p236, %p237
      %p239 = scmp.ne.s32.totalorder %s231, %s234
      %p240 = scmp.eq.s32.totalorder %s35, 0
      %p241 = por %p239, %p240
      %p242 = scmp.ne.s32.totalorder %s231, %s234
      %p243 = scmp.eq.s32.totalorder %s40, 5
      %p244 = por %p242, %p243
      %p245 = scmp.ne.s32.totalorder %s234, %s235
      %p246 = scmp.eq.s32.totalorder %s40, 0
      %p247 = por %p245, %p246
      %p248 = scmp.ne.s32.totalorder %s234, %s235
      %p249 = scmp.eq.s32.totalorder %s41, 5
      %p250 = por %p248, %p249
      %p252 = scmp.ne.s32.totalorder %s235, %s251
      %p253 = scmp.eq.s32.totalorder %s41, 0
      %p254 = por %p252, %p253
      %s255 = ssub.s32 %s42, %s54
      %p256 = scmp.eq.s32.totalorder %s255, 0
      %s258 = sadd.s32 %s257, 1
      %s259 = scalar_select %p256, %s257, %s258
      %p262 = pneg %p256
      %p263 = scmp.eq.s32.totalorder %s35, 5
      %p264 = por %p262, %p263
      %p265 = scmp.ne.s32.totalorder %s257, %s260
      %p266 = scmp.eq.s32.totalorder %s35, 0
      %p267 = por %p265, %p266
      %p268 = scmp.ne.s32.totalorder %s257, %s260
      %p269 = scmp.eq.s32.totalorder %s40, 5
      %p270 = por %p268, %p269
      %p271 = scmp.ne.s32.totalorder %s260, %s261
      %p272 = scmp.eq.s32.totalorder %s40, 0
      %p273 = por %p271, %p272
      %p274 = scmp.ne.s32.totalorder %s260, %s261
      %p275 = scmp.eq.s32.totalorder %s41, 5
      %p276 = por %p274, %p275
      %p278 = scmp.ne.s32.totalorder %s261, %s277
      %p279 = scmp.eq.s32.totalorder %s41, 0
      %p280 = por %p278, %p279
      %s281 = ssub.s32 %s42, %s54
      %p282 = scmp.eq.s32.totalorder %s281, 0
      %s284 = sadd.s32 %s283, 1
      %s285 = scalar_select %p282, %s283, %s284
      %p288 = pneg %p282
      %p289 = scmp.eq.s32.totalorder %s35, 5
      %p290 = por %p288, %p289
      %p291 = scmp.ne.s32.totalorder %s283, %s286
      %p292 = scmp.eq.s32.totalorder %s35, 0
      %p293 = por %p291, %p292
      %p294 = scmp.ne.s32.totalorder %s283, %s286
      %p295 = scmp.eq.s32.totalorder %s40, 5
      %p296 = por %p294, %p295
      %p297 = scmp.ne.s32.totalorder %s286, %s287
      %p298 = scmp.eq.s32.totalorder %s40, 0
      %p299 = por %p297, %p298
      %p300 = scmp.ne.s32.totalorder %s286, %s287
      %p301 = scmp.eq.s32.totalorder %s41, 5
      %p302 = por %p300, %p301
      %p304 = scmp.ne.s32.totalorder %s287, %s303
      %p305 = scmp.eq.s32.totalorder %s41, 0
      %p306 = por %p304, %p305
      %s307 = ssub.s32 %s42, %s54
      %p308 = scmp.eq.s32.totalorder %s307, 0
      %s310 = sadd.s32 %s309, 1
      %s311 = scalar_select %p308, %s309, %s310
      %p314 = pneg %p308
      %p315 = scmp.eq.s32.totalorder %s35, 5
      %p316 = por %p314, %p315
      %p317 = scmp.ne.s32.totalorder %s309, %s312
      %p318 = scmp.eq.s32.totalorder %s35, 0
      %p319 = por %p317, %p318
      %p320 = scmp.ne.s32.totalorder %s309, %s312
      %p321 = scmp.eq.s32.totalorder %s40, 5
      %p322 = por %p320, %p321
      %p323 = scmp.ne.s32.totalorder %s312, %s313
      %p324 = scmp.eq.s32.totalorder %s40, 0
      %p325 = por %p323, %p324
      %p326 = scmp.ne.s32.totalorder %s312, %s313
      %p327 = scmp.eq.s32.totalorder %s41, 5
      %p328 = por %p326, %p327
      %p330 = scmp.ne.s32.totalorder %s313, %s329
      %p331 = scmp.eq.s32.totalorder %s41, 0
      %p332 = por %p330, %p331
      %s333 = ssub.s32 %s43, %s50
      %s334 = ssub.s32 %s42, %s54
      %s335 = sor.u32 %s333, %s334
      %p336 = scmp.eq.s32.totalorder %s335, 0
      %s338 = sadd.s32 %s337, 1
      %s339 = scalar_select %p336, %s337, %s338
      %p342 = pneg %p336
      %p343 = scmp.eq.s32.totalorder %s35, 5
      %p344 = por %p342, %p343
      %p345 = scmp.ne.s32.totalorder %s337, %s340
      %p346 = scmp.eq.s32.totalorder %s35, 0
      %p347 = por %p345, %p346
      %p348 = scmp.ne.s32.totalorder %s337, %s340
      %p349 = scmp.eq.s32.totalorder %s40, 5
      %p350 = por %p348, %p349
      %p351 = scmp.ne.s32.totalorder %s340, %s341
      %p352 = scmp.eq.s32.totalorder %s40, 0
      %p353 = por %p351, %p352
      %p354 = scmp.ne.s32.totalorder %s340, %s341
      %p355 = scmp.eq.s32.totalorder %s41, 5
      %p356 = por %p354, %p355
      %p358 = scmp.ne.s32.totalorder %s341, %s357
      %p359 = scmp.eq.s32.totalorder %s41, 0
      %p360 = por %p358, %p359
      %s361 = ssub.s32 %s42, %s54
      %p362 = scmp.eq.s32.totalorder %s361, 0
      %s364 = sadd.s32 %s363, 1
      %s365 = scalar_select %p362, %s363, %s364
      %p368 = pneg %p362
      %p369 = scmp.eq.s32.totalorder %s35, 5
      %p370 = por %p368, %p369
      %p371 = scmp.ne.s32.totalorder %s363, %s366
      %p372 = scmp.eq.s32.totalorder %s35, 0
      %p373 = por %p371, %p372
      %p374 = scmp.ne.s32.totalorder %s363, %s366
      %p375 = scmp.eq.s32.totalorder %s40, 5
      %p376 = por %p374, %p375
      %p377 = scmp.ne.s32.totalorder %s366, %s367
      %p378 = scmp.eq.s32.totalorder %s40, 0
      %p379 = por %p377, %p378
      %p380 = scmp.ne.s32.totalorder %s366, %s367
      %p381 = scmp.eq.s32.totalorder %s41, 5
      %p382 = por %p380, %p381
      %p384 = scmp.ne.s32.totalorder %s367, %s383
      %p385 = scmp.eq.s32.totalorder %s41, 0
      %p386 = por %p384, %p385
      %s387 = ssub.s32 %s42, %s54
      %p388 = scmp.eq.s32.totalorder %s387, 0
      %s390 = sadd.s32 %s389, 1
      %s391 = scalar_select %p388, %s389, %s390
      %p394 = pneg %p388
      %p395 = scmp.eq.s32.totalorder %s35, 5
      %p396 = por %p394, %p395
      %p397 = scmp.ne.s32.totalorder %s389, %s392
      %p398 = scmp.eq.s32.totalorder %s35, 0
      %p399 = por %p397, %p398
      %p400 = scmp.ne.s32.totalorder %s389, %s392
      %p401 = scmp.eq.s32.totalorder %s40, 5
      %p402 = por %p400, %p401
      %p403 = scmp.ne.s32.totalorder %s392, %s393
      %p404 = scmp.eq.s32.totalorder %s40, 0
      %p405 = por %p403, %p404
      %p406 = scmp.ne.s32.totalorder %s392, %s393
      %p407 = scmp.eq.s32.totalorder %s41, 5
      %p408 = por %p406, %p407
      %p410 = scmp.ne.s32.totalorder %s393, %s409
      %p411 = scmp.eq.s32.totalorder %s41, 0
      %p412 = por %p410, %p411
      %s413 = ssub.s32 %s42, %s54
      %p414 = scmp.eq.s32.totalorder %s413, 0
      %s416 = sadd.s32 %s415, 1
      %s417 = scalar_select %p414, %s415, %s416
      %p420 = pneg %p414
      %p421 = scmp.eq.s32.totalorder %s35, 5
      %p422 = por %p420, %p421
      %p423 = scmp.ne.s32.totalorder %s415, %s418
      %p424 = scmp.eq.s32.totalorder %s35, 0
      %p425 = por %p423, %p424
      %p426 = scmp.ne.s32.totalorder %s415, %s418
      %p427 = scmp.eq.s32.totalorder %s40, 5
      %p428 = por %p426, %p427
      %p429 = scmp.ne.s32.totalorder %s418, %s419
      %p430 = scmp.eq.s32.totalorder %s40, 0
      %p431 = por %p429, %p430
      %p432 = scmp.ne.s32.totalorder %s418, %s419
      %p433 = scmp.eq.s32.totalorder %s41, 5
      %p434 = por %p432, %p433
      %p436 = scmp.ne.s32.totalorder %s419, %s435
      %p437 = scmp.eq.s32.totalorder %s41, 0
      %p438 = por %p436, %p437
      %p439 = scmp.le.s32.totalorder 1, %s35
      %p440 = scmp.lt.s32.totalorder %s35, 7
      %p441 = pnand %p439, %p440
      %p442 = pneg %p441
      // Predicated region
      $region9: #{_izhikevich_call.1} parent=5 // pred_check
        _
      $region10: #{_izhikevich_call.1} parent=5 // pred_check_branch
        %444 = sbr.rel (%p441) target = $region12
      $region11: #{_izhikevich_call.1} parent=5 // pred_region
        %s445 = ssub.s32 %s35, 1
        // Predicated region
        $region13: #{_izhikevich_call.1} parent=11 // pred_check
          %p446 = pneg %p68
        $region14: #{_izhikevich_call.1} parent=11 // pred_check_branch
          %448 = sbr.rel (%p446) target = $region16
        $region15: #{_izhikevich_call.1} parent=11 // pred_region
          %s450 = ssub.s32 16, 16
          %451 = vsyncadd [#allocation5], %s450
          %454 = dma.hbm_to_smem %s0, 16, [#allocation2], [#allocation5]
        $region16: #{_izhikevich_call.1} parent=11 // pred_fallthru
          _
        // Predicated region
        $region17: #{_izhikevich_call.1} parent=11 // pred_check
          %p455 = pneg %p89
        $region18: #{_izhikevich_call.1} parent=11 // pred_check_branch
          %457 = sbr.rel (%p455) target = $region20
        $region19: #{_izhikevich_call.1} parent=11 // pred_region
          %s459 = ssub.s32 16, 16
          %460 = vsyncadd [#allocation6], %s459
          %s462 = sshll.u32 %s1, 4
          %s463 = int_to_ptr.vmem [resolvable:$true] %s462
          %465 = dma.vmem_to_smem %s463, 16, [#allocation7], [#allocation6]
        $region20: #{_izhikevich_call.1} parent=11 // pred_fallthru
          _
        // Predicated region
        $region21: #{_izhikevich_call.1} parent=11 // pred_check
          %p466 = pneg %p143
        $region22: #{_izhikevich_call.1} parent=11 // pred_check_branch
          %468 = sbr.rel (%p466) target = $region24
        $region23: #{_izhikevich_call.1} parent=11 // pred_region
          %s469 = smul.u32 3, %s44
          %s471 = ssub.s32 384, 384
          %472 = vsyncadd [#allocation10], %s471
          %s473 = smul.addr %s469, 128
          %s474 = scalar_lea.hbm %s3, %s473
          %s476 = sshll.u32 [#allocation9], 4
          %s477 = int_to_ptr.vmem [resolvable:$true] %s476
          %479 = dma.hbm_to_vmem [thread:$0]  %s474, 384, %s477, [#allocation10]
        $region24: #{_izhikevich_call.1} parent=11 // pred_fallthru
          _
        // Predicated region
        $region25: #{_izhikevich_call.1} parent=11 // pred_check
          %p480 = pneg %p169
        $region26: #{_izhikevich_call.1} parent=11 // pred_check_branch
          %482 = sbr.rel (%p480) target = $region28
        $region27: #{_izhikevich_call.1} parent=11 // pred_region
          %s483 = smul.u32 3, %s44
          %s485 = ssub.s32 384, 384
          %486 = vsyncadd [#allocation10], %s485
          %s487 = smul.addr %s483, 128
          %s488 = scalar_lea.hbm %s4, %s487
          %s490 = sshll.u32 [#allocation11], 4
          %s491 = int_to_ptr.vmem [resolvable:$true] %s490
          %493 = dma.hbm_to_vmem [thread:$0]  %s488, 384, %s491, [#allocation10]
        $region28: #{_izhikevich_call.1} parent=11 // pred_fallthru
          _
        // Predicated region
        $region29: #{_izhikevich_call.1} parent=11 // pred_check
          %p494 = pneg %p195
        $region30: #{_izhikevich_call.1} parent=11 // pred_check_branch
          %496 = sbr.rel (%p494) target = $region32
        $region31: #{_izhikevich_call.1} parent=11 // pred_region
          %s497 = smul.u32 3, %s44
          %s499 = ssub.s32 384, 384
          %500 = vsyncadd [#allocation13], %s499
          %s501 = smul.addr %s497, 128
          %s502 = scalar_lea.hbm %s5, %s501
          %s504 = sshll.u32 [#allocation12], 4
          %s505 = int_to_ptr.vmem [resolvable:$true] %s504
          %507 = dma.hbm_to_vmem [thread:$0]  %s502, 384, %s505, [#allocation13]
        $region32: #{_izhikevich_call.1} parent=11 // pred_fallthru
          _
        // Predicated region
        $region33: #{_izhikevich_call.1} parent=11 // pred_check
          %p508 = pneg %p221
        $region34: #{_izhikevich_call.1} parent=11 // pred_check_branch
          %510 = sbr.rel (%p508) target = $region36
        $region35: #{_izhikevich_call.1} parent=11 // pred_region
          %s511 = smul.u32 3, %s44
          %s513 = ssub.s32 384, 384
          %514 = vsyncadd [#allocation13], %s513
          %s515 = smul.addr %s511, 128
          %s516 = scalar_lea.hbm %s6, %s515
          %s518 = sshll.u32 [#allocation14], 4
          %s519 = int_to_ptr.vmem [resolvable:$true] %s518
          %521 = dma.hbm_to_vmem [thread:$0]  %s516, 384, %s519, [#allocation13]
        $region36: #{_izhikevich_call.1} parent=11 // pred_fallthru
          _
        // Predicated region
        $region37: #{_izhikevich_call.1} parent=11 // pred_check
          %p522 = pneg %p247
        $region38: #{_izhikevich_call.1} parent=11 // pred_check_branch
          %524 = sbr.rel (%p522) target = $region40
        $region39: #{_izhikevich_call.1} parent=11 // pred_region
          %s525 = smul.u32 3, %s44
          %s527 = ssub.s32 384, 384
          %528 = vsyncadd [#allocation16], %s527
          %s529 = smul.addr %s525, 128
          %s530 = scalar_lea.hbm %s7, %s529
          %s532 = sshll.u32 [#allocation15], 4
          %s533 = int_to_ptr.vmem [resolvable:$true] %s532
          %535 = dma.hbm_to_vmem [thread:$0]  %s530, 384, %s533, [#allocation16]
        $region40: #{_izhikevich_call.1} parent=11 // pred_fallthru
          _
        // Predicated region
        $region41: #{_izhikevich_call.1} parent=11 // pred_check
          %p536 = pneg %p273
        $region42: #{_izhikevich_call.1} parent=11 // pred_check_branch
          %538 = sbr.rel (%p536) target = $region44
        $region43: #{_izhikevich_call.1} parent=11 // pred_region
          %s539 = smul.u32 3, %s44
          %s541 = ssub.s32 384, 384
          %542 = vsyncadd [#allocation16], %s541
          %s543 = smul.addr %s539, 128
          %s544 = scalar_lea.hbm %s8, %s543
          %s546 = sshll.u32 [#allocation17], 4
          %s547 = int_to_ptr.vmem [resolvable:$true] %s546
          %549 = dma.hbm_to_vmem [thread:$0]  %s544, 384, %s547, [#allocation16]
        $region44: #{_izhikevich_call.1} parent=11 // pred_fallthru
          _
        // Predicated region
        $region45: #{_izhikevich_call.1} parent=11 // pred_check
          %p550 = pneg %p299
        $region46: #{_izhikevich_call.1} parent=11 // pred_check_branch
          %552 = sbr.rel (%p550) target = $region48
        $region47: #{_izhikevich_call.1} parent=11 // pred_region
          %s553 = smul.u32 3, %s44
          %s555 = ssub.s32 384, 384
          %556 = vsyncadd [#allocation19], %s555
          %s557 = smul.addr %s553, 128
          %s558 = scalar_lea.hbm %s9, %s557
          %s560 = sshll.u32 [#allocation18], 4
          %s561 = int_to_ptr.vmem [resolvable:$true] %s560
          %563 = dma.hbm_to_vmem [thread:$0]  %s558, 384, %s561, [#allocation19]
        $region48: #{_izhikevich_call.1} parent=11 // pred_fallthru
          _
        // Predicated region
        $region49: #{_izhikevich_call.1} parent=11 // pred_check
          %p564 = pneg %p325
        $region50: #{_izhikevich_call.1} parent=11 // pred_check_branch
          %566 = sbr.rel (%p564) target = $region52
        $region51: #{_izhikevich_call.1} parent=11 // pred_region
          %s567 = smul.u32 3, %s44
          %s569 = ssub.s32 384, 384
          %570 = vsyncadd [#allocation19], %s569
          %s571 = smul.addr %s567, 128
          %s572 = scalar_lea.hbm %s10, %s571
          %s574 = sshll.u32 [#allocation20], 4
          %s575 = int_to_ptr.vmem [resolvable:$true] %s574
          %577 = dma.hbm_to_vmem [thread:$0]  %s572, 384, %s575, [#allocation19]
        $region52: #{_izhikevich_call.1} parent=11 // pred_fallthru
          _
      $region12: #{_izhikevich_call.1} parent=5 // pred_fallthru
        _
      %p578 = scmp.lt.s32.totalorder %s35, 6
      // Predicated region
      $region53: #{_izhikevich_call.1} parent=5 // pred_check
        %p579 = pneg %p578
      $region54: #{_izhikevich_call.1} parent=5 // pred_check_branch
        %581 = sbr.rel (%p579) target = $region56
      $region55: #{_izhikevich_call.1} parent=5 // pred_region
        // Predicated region
        $region57: #{_izhikevich_call.1} parent=55 // pred_check
          %p582 = pneg %p111
        $region58: #{_izhikevich_call.1} parent=55 // pred_check_branch
          %584 = sbr.rel (%p582) target = $region60
        $region59: #{_izhikevich_call.1} parent=55 // pred_region
          %s585 = sand.u32 %s101, 1
          %s586 = scalar_lea.sflag [#allocation3], %s585
          %s587 = sand.u32 %s101, 1
          %s588 = smul.addr %s587, 24
          %s589 = scalar_lea.vmem [#allocation8], %s588
          %s590 = smul.u32 3, %s42
          %s592 = ssub.s32 384, 384
          %593 = vsyncadd %s586, %s592
          %s594 = smul.addr %s43, 3
          %s595 = sadd.s32 %s590, %s594
          %s596 = smul.addr %s595, 128
          %s597 = scalar_lea.hbm %s2, %s596
          %s599 = sshll.u32 %s589, 4
          %s600 = int_to_ptr.vmem [resolvable:$true] %s599
          %602 = dma.hbm_to_vmem [thread:$0]  %s597, 384, %s600, %s586
        $region60: #{_izhikevich_call.1} parent=55 // pred_fallthru
          _
      $region56: #{_izhikevich_call.1} parent=5 // pred_fallthru
        _
      %p603 = scmp.le.s32.totalorder 1, %s35
      %p604 = scmp.lt.s32.totalorder %s35, 7
      %p605 = pnand %p603, %p604
      %p606 = pneg %p605
      // Predicated region
      $region61: #{_izhikevich_call.1} parent=5 // pred_check
        _
      $region62: #{_izhikevich_call.1} parent=5 // pred_check_branch
        %608 = sbr.rel (%p605) target = $region64
      $region63: #{_izhikevich_call.1} parent=5 // pred_region
        %s609 = ssub.s32 %s35, 1
        // Predicated region
        $region65: #{_izhikevich_call.1} parent=63 // pred_check
          %p610 = pneg %p68
        $region66: #{_izhikevich_call.1} parent=63 // pred_check_branch
          %612 = sbr.rel (%p610) target = $region68
        $region67: #{_izhikevich_call.1} parent=63 // pred_region
          %613 = dma.done [#allocation5], 16
        $region68: #{_izhikevich_call.1} parent=63 // pred_fallthru
          _
        // Predicated region
        $region69: #{_izhikevich_call.1} parent=63 // pred_check
          %p614 = pneg %p89
        $region70: #{_izhikevich_call.1} parent=63 // pred_check_branch
          %616 = sbr.rel (%p614) target = $region72
        $region71: #{_izhikevich_call.1} parent=63 // pred_region
          %617 = dma.done [#allocation6], 16
        $region72: #{_izhikevich_call.1} parent=63 // pred_fallthru
          _
        %s618 = sand.u32 %s104, 1
        %s619 = scalar_lea.sflag [#allocation3], %s618
        %s620 = sand.u32 %s104, 1
        %s621 = smul.addr %s620, 24
        %s622 = scalar_lea.vmem [#allocation8], %s621
        // Predicated region
        $region73: #{_izhikevich_call.1} parent=63 // pred_check
          %p623 = pneg %p117
        $region74: #{_izhikevich_call.1} parent=63 // pred_check_branch
          %625 = sbr.rel (%p623) target = $region76
        $region75: #{_izhikevich_call.1} parent=63 // pred_region
          %626 = dma.done %s619, 384
        $region76: #{_izhikevich_call.1} parent=63 // pred_fallthru
          _
        // Predicated region
        $region77: #{_izhikevich_call.1} parent=63 // pred_check
          %p627 = pneg %p143
        $region78: #{_izhikevich_call.1} parent=63 // pred_check_branch
          %629 = sbr.rel (%p627) target = $region80
        $region79: #{_izhikevich_call.1} parent=63 // pred_region
          %630 = dma.done [#allocation10], 384
        $region80: #{_izhikevich_call.1} parent=63 // pred_fallthru
          _
        // Predicated region
        $region81: #{_izhikevich_call.1} parent=63 // pred_check
          %p631 = pneg %p169
        $region82: #{_izhikevich_call.1} parent=63 // pred_check_branch
          %633 = sbr.rel (%p631) target = $region84
        $region83: #{_izhikevich_call.1} parent=63 // pred_region
          %634 = dma.done [#allocation10], 384
        $region84: #{_izhikevich_call.1} parent=63 // pred_fallthru
          _
        // Predicated region
        $region85: #{_izhikevich_call.1} parent=63 // pred_check
          %p635 = pneg %p195
        $region86: #{_izhikevich_call.1} parent=63 // pred_check_branch
          %637 = sbr.rel (%p635) target = $region88
        $region87: #{_izhikevich_call.1} parent=63 // pred_region
          %638 = dma.done [#allocation13], 384
        $region88: #{_izhikevich_call.1} parent=63 // pred_fallthru
          _
        // Predicated region
        $region89: #{_izhikevich_call.1} parent=63 // pred_check
          %p639 = pneg %p221
        $region90: #{_izhikevich_call.1} parent=63 // pred_check_branch
          %641 = sbr.rel (%p639) target = $region92
        $region91: #{_izhikevich_call.1} parent=63 // pred_region
          %642 = dma.done [#allocation13], 384
        $region92: #{_izhikevich_call.1} parent=63 // pred_fallthru
          _
        // Predicated region
        $region93: #{_izhikevich_call.1} parent=63 // pred_check
          %p643 = pneg %p247
        $region94: #{_izhikevich_call.1} parent=63 // pred_check_branch
          %645 = sbr.rel (%p643) target = $region96
        $region95: #{_izhikevich_call.1} parent=63 // pred_region
          %646 = dma.done [#allocation16], 384
        $region96: #{_izhikevich_call.1} parent=63 // pred_fallthru
          _
        // Predicated region
        $region97: #{_izhikevich_call.1} parent=63 // pred_check
          %p647 = pneg %p273
        $region98: #{_izhikevich_call.1} parent=63 // pred_check_branch
          %649 = sbr.rel (%p647) target = $region100
        $region99: #{_izhikevich_call.1} parent=63 // pred_region
          %650 = dma.done [#allocation16], 384
        $region100: #{_izhikevich_call.1} parent=63 // pred_fallthru
          _
        // Predicated region
        $region101: #{_izhikevich_call.1} parent=63 // pred_check
          %p651 = pneg %p299
        $region102: #{_izhikevich_call.1} parent=63 // pred_check_branch
          %653 = sbr.rel (%p651) target = $region104
        $region103: #{_izhikevich_call.1} parent=63 // pred_region
          %654 = dma.done [#allocation19], 384
        $region104: #{_izhikevich_call.1} parent=63 // pred_fallthru
          _
        // Predicated region
        $region105: #{_izhikevich_call.1} parent=63 // pred_check
          %p655 = pneg %p325
        $region106: #{_izhikevich_call.1} parent=63 // pred_check_branch
          %657 = sbr.rel (%p655) target = $region108
        $region107: #{_izhikevich_call.1} parent=63 // pred_region
          %658 = dma.done [#allocation19], 384
        $region108: #{_izhikevich_call.1} parent=63 // pred_fallthru
          _
        %659 = sfence
        %p660 = pneg %p68
        %p661 = pneg %p65
        %p662 = pneg %p89
        %p663 = pneg %p86
        %s664 = sand.u32 %s104, 1
        %s665 = scalar_lea.sflag [#allocation3], %s664
        %s666 = sand.u32 %s104, 1
        %s667 = smul.addr %s666, 24
        %s668 = scalar_lea.vmem [#allocation8], %s667
        %p669 = pneg %p117
        %p670 = pneg %p114
        %p671 = pneg %p143
        %p672 = pneg %p140
        %p673 = pneg %p169
        %p674 = pneg %p166
        %p675 = pneg %p195
        %p676 = pneg %p192
        %p677 = pneg %p221
        %p678 = pneg %p218
        %p679 = pneg %p247
        %p680 = pneg %p244
        %p681 = pneg %p273
        %p682 = pneg %p270
        %p683 = pneg %p299
        %p684 = pneg %p296
        %p685 = pneg %p325
        %p686 = pneg %p322
        %p687 = pneg %p353
        %p688 = pneg %p350
        %s689 = sand.u32 %s340, 1
        %s690 = scalar_lea.sflag [#allocation4], %s689
        %s691 = sand.u32 %s340, 1
        %s692 = smul.addr %s691, 24
        %s693 = scalar_lea.vmem [#allocation21], %s692
        %p694 = pneg %p379
        %p695 = pneg %p376
        %p696 = pneg %p405
        %p697 = pneg %p402
        %p698 = pneg %p431
        %p699 = pneg %p428
        %s700 = smul.u32 3, %s44
        %s701 = smul.u32 3, %s44
        %s702 = smul.u32 3, %s44
        %s703 = smul.u32 3, %s44
        %s704 = smul.u32 3, %s44
        %s705 = smul.u32 3, %s44
        %s706 = smul.u32 3, %s44
        %s707 = smul.u32 3, %s44
        %s708 = smul.u32 3, %s44
        %s709 = smul.u32 3, %s44
        %s710 = smul.u32 3, %s44
        %s711 = smul.u32 3, %s44
        %s712 = smul.u32 3, %s44
        %p713 = scmp.eq.s32.totalorder %s45, 0
        // Predicated region
        $region109: #{_izhikevich_call.1} parent=63 // pred_check
          %p714 = pneg %p713
        $region110: #{_izhikevich_call.1} parent=63 // pred_check_branch
          %716 = sbr.rel (%p714) target = $region112
        $region111: #{_izhikevich_call.1} parent=63 // pred_region
          %v717 = vld [vmem:[#allocation9] sm:$0xff]
          %v718 = vld [vmem:[#allocation9 + $0x8] sm:$0xff]
          %v719 = vld [vmem:[#allocation9 + $0x10] sm:$0xff]
          %720 = vst [vmem:[#allocation22] sm:$0xff] %v717
          %721 = vst [vmem:[#allocation22 + $0x8] sm:$0xff] %v718
          %722 = vst [vmem:[#allocation22 + $0x10] sm:$0xff] %v719
          %v723 = vld [vmem:[#allocation11] sm:$0xff]
          %v724 = vld [vmem:[#allocation11 + $0x8] sm:$0xff]
          %v725 = vld [vmem:[#allocation11 + $0x10] sm:$0xff]
          %726 = vst [vmem:[#allocation24] sm:$0xff] %v723
          %727 = vst [vmem:[#allocation24 + $0x8] sm:$0xff] %v724
          %728 = vst [vmem:[#allocation24 + $0x10] sm:$0xff] %v725
          %v729 = vld [vmem:[#allocation20] sm:$0xff]
          %v730 = vld [vmem:[#allocation20 + $0x8] sm:$0xff]
          %v731 = vld [vmem:[#allocation20 + $0x10] sm:$0xff]
          %732 = vst [vmem:[#allocation25] sm:$0xff] %v729
          %733 = vst [vmem:[#allocation25 + $0x8] sm:$0xff] %v730
          %734 = vst [vmem:[#allocation25 + $0x10] sm:$0xff] %v731
        $region112: #{_izhikevich_call.1} parent=63 // pred_fallthru
          _
        %v735 = vld [vmem:[#allocation22] sm:$0xff]
        %v736 = vld [vmem:[#allocation22 + $0x8] sm:$0xff]
        %v737 = vld [vmem:[#allocation22 + $0x10] sm:$0xff]
        %v738 = vld [vmem:[#allocation24] sm:$0xff]
        %v739 = vld [vmem:[#allocation24 + $0x8] sm:$0xff]
        %v740 = vld [vmem:[#allocation24 + $0x10] sm:$0xff]
        %s741 = sld [smem:[#allocation2]]
        %s742 = sld [smem:[#allocation2 + $0x1]]
        %s743 = sld [smem:[#allocation2 + $0x2]]
        %s744 = sld [smem:[#allocation7 + %s45]]
        %v745 = vstv %s741
        %v746 = vmul.f32 %v745, %v735
        %v747 = vmul.f32 %v745, %v736
        %v748 = vmul.f32 %v745, %v737
        %v749 = vstv %s742
        %v750 = vadd.f32 %v746, %v749
        %v751 = vadd.f32 %v747, %v749
        %v752 = vadd.f32 %v748, %v749
        %v753 = vmul.f32 %v735, %v750
        %v754 = vmul.f32 %v736, %v751
        %v755 = vmul.f32 %v737, %v752
        %v756 = vstv %s743
        %v757 = vadd.f32 %v753, %v756
        %v758 = vadd.f32 %v754, %v756
        %v759 = vadd.f32 %v755, %v756
        %v760 = vsub.f32 %v757, %v738
        %v761 = vsub.f32 %v758, %v739
        %v762 = vsub.f32 %v759, %v740
        %v763 = vld [vmem:[%s622] sm:$0xff]
        %v764 = vld [vmem:[%s622 + $0x8] sm:$0xff]
        %v765 = vld [vmem:[%s622 + $0x10] sm:$0xff]
        %v766 = vadd.f32 %v760, %v763
        %v767 = vadd.f32 %v761, %v764
        %v768 = vadd.f32 %v762, %v765
        %v769 = vld [vmem:[#allocation18] sm:$0xff]
        %v770 = vld [vmem:[#allocation18 + $0x8] sm:$0xff]
        %v771 = vld [vmem:[#allocation18 + $0x10] sm:$0xff]
        %v772 = vadd.f32 %v766, %v769
        %v773 = vadd.f32 %v767, %v770
        %v774 = vadd.f32 %v768, %v771
        %v775 = vld [vmem:[#allocation12] sm:$0xff]
        %v776 = vld [vmem:[#allocation12 + $0x8] sm:$0xff]
        %v777 = vld [vmem:[#allocation12 + $0x10] sm:$0xff]
        %v778 = vld [vmem:[#allocation14] sm:$0xff]
        %v779 = vld [vmem:[#allocation14 + $0x8] sm:$0xff]
        %v780 = vld [vmem:[#allocation14 + $0x10] sm:$0xff]
        %v781 = vmul.f32 %v778, %v735
        %v782 = vmul.f32 %v779, %v736
        %v783 = vmul.f32 %v780, %v737
        %v784 = vsub.f32 %v781, %v738
        %v785 = vsub.f32 %v782, %v739
        %v786 = vsub.f32 %v783, %v740
        %v787 = vmul.f32 %v775, %v784
        %v788 = vmul.f32 %v776, %v785
        %v789 = vmul.f32 %v777, %v786
        %v790 = vadd.f32 %v735, %v772
        %v791 = vadd.f32 %v736, %v773
        %v792 = vadd.f32 %v737, %v774
        %v793 = vadd.f32 %v738, %v787
        %v794 = vadd.f32 %v739, %v788
        %v795 = vadd.f32 %v740, %v789
        %vm796 = vcmp.gt.f32.partialorder %v790, 30.0
        %vm797 = vcmp.gt.f32.partialorder %v791, 30.0
        %vm798 = vcmp.gt.f32.partialorder %v792, 30.0
        %v799 = vsel %vm796, 1, 0
        %v800 = vsel %vm797, 1, 0
        %v801 = vsel %vm798, 1, 0
        %v802 = vcvt.s32.f32 %v799
        %v803 = vcvt.s32.f32 %v800
        %v804 = vcvt.s32.f32 %v801
        %805 = vst [vmem:[%s693] sm:$0xff] %v802
        %806 = vst [vmem:[%s693 + $0x8] sm:$0xff] %v803
        %807 = vst [vmem:[%s693 + $0x10] sm:$0xff] %v804
        %v808 = vld [vmem:[#allocation15] sm:$0xff]
        %v809 = vld [vmem:[#allocation15 + $0x8] sm:$0xff]
        %v810 = vld [vmem:[#allocation15 + $0x10] sm:$0xff]
        %v811 = vsel %vm796, %v808, %v790
        %v812 = vsel %vm797, %v809, %v791
        %v813 = vsel %vm798, %v810, %v792
        %814 = vst [vmem:[#allocation22] sm:$0xff] %v811
        %815 = vst [vmem:[#allocation22 + $0x8] sm:$0xff] %v812
        %816 = vst [vmem:[#allocation22 + $0x10] sm:$0xff] %v813
        %v817 = vld [vmem:[#allocation17] sm:$0xff]
        %v818 = vld [vmem:[#allocation17 + $0x8] sm:$0xff]
        %v819 = vld [vmem:[#allocation17 + $0x10] sm:$0xff]
        %v820 = vadd.f32 %v793, %v817
        %v821 = vadd.f32 %v794, %v818
        %v822 = vadd.f32 %v795, %v819
        %v823 = vsel %vm796, %v820, %v793
        %v824 = vsel %vm797, %v821, %v794
        %v825 = vsel %vm798, %v822, %v795
        %826 = vst [vmem:[#allocation24] sm:$0xff] %v823
        %827 = vst [vmem:[#allocation24 + $0x8] sm:$0xff] %v824
        %828 = vst [vmem:[#allocation24 + $0x10] sm:$0xff] %v825
        %v829 = vld [vmem:[#allocation25] sm:$0xff]
        %v830 = vld [vmem:[#allocation25 + $0x8] sm:$0xff]
        %v831 = vld [vmem:[#allocation25 + $0x10] sm:$0xff]
        %v832 = vstv %s744
        %v833 = vsel %vm796, %v832, %v829
        %v834 = vsel %vm797, %v832, %v830
        %v835 = vsel %vm798, %v832, %v831
        %836 = vst [vmem:[#allocation25] sm:$0xff] %v833
        %837 = vst [vmem:[#allocation25 + $0x8] sm:$0xff] %v834
        %838 = vst [vmem:[#allocation25 + $0x10] sm:$0xff] %v835
        %s839 = sand.u32 %s340, 1
        %s840 = scalar_lea.sflag [#allocation4], %s839
        %s841 = sand.u32 %s340, 1
        %s842 = smul.addr %s841, 24
        %s843 = scalar_lea.vmem [#allocation21], %s842
        // Predicated region
        $region113: #{_izhikevich_call.1} parent=63 // pred_check
          %p844 = pneg %p350
        $region114: #{_izhikevich_call.1} parent=63 // pred_check_branch
          %846 = sbr.rel (%p844) target = $region116
        $region115: #{_izhikevich_call.1} parent=63 // pred_region
          %s847 = smul.u32 3, %s44
          %s849 = ssub.s32 384, 384
          %850 = vsyncadd %s840, %s849
          %s851 = smul.addr %s45, 3
          %s852 = sadd.s32 %s847, %s851
          %s853 = smul.addr %s852, 128
          %s854 = scalar_lea.hbm %s11, %s853
          %s856 = sshll.u32 %s843, 4
          %s857 = int_to_ptr.vmem [resolvable:$true] %s856
          %859 = dma.vmem_to_hbm [thread:$0]  %s857, 384, %s854, %s840
        $region116: #{_izhikevich_call.1} parent=63 // pred_fallthru
          _
        // Predicated region
        $region117: #{_izhikevich_call.1} parent=63 // pred_check
          %p860 = pneg %p376
        $region118: #{_izhikevich_call.1} parent=63 // pred_check_branch
          %862 = sbr.rel (%p860) target = $region120
        $region119: #{_izhikevich_call.1} parent=63 // pred_region
          %s863 = smul.u32 3, %s44
          %s865 = ssub.s32 384, 384
          %866 = vsyncadd [#allocation23], %s865
          %s867 = smul.addr %s863, 128
          %s868 = scalar_lea.hbm %s12, %s867
          %s870 = sshll.u32 [#allocation22], 4
          %s871 = int_to_ptr.vmem [resolvable:$true] %s870
          %873 = dma.vmem_to_hbm [thread:$0]  %s871, 384, %s868, [#allocation23]
        $region120: #{_izhikevich_call.1} parent=63 // pred_fallthru
          _
        // Predicated region
        $region121: #{_izhikevich_call.1} parent=63 // pred_check
          %p874 = pneg %p402
        $region122: #{_izhikevich_call.1} parent=63 // pred_check_branch
          %876 = sbr.rel (%p874) target = $region124
        $region123: #{_izhikevich_call.1} parent=63 // pred_region
          %s877 = smul.u32 3, %s44
          %s879 = ssub.s32 384, 384
          %880 = vsyncadd [#allocation23], %s879
          %s881 = smul.addr %s877, 128
          %s882 = scalar_lea.hbm %s13, %s881
          %s884 = sshll.u32 [#allocation24], 4
          %s885 = int_to_ptr.vmem [resolvable:$true] %s884
          %887 = dma.vmem_to_hbm [thread:$0]  %s885, 384, %s882, [#allocation23]
        $region124: #{_izhikevich_call.1} parent=63 // pred_fallthru
          _
        // Predicated region
        $region125: #{_izhikevich_call.1} parent=63 // pred_check
          %p888 = pneg %p428
        $region126: #{_izhikevich_call.1} parent=63 // pred_check_branch
          %890 = sbr.rel (%p888) target = $region128
        $region127: #{_izhikevich_call.1} parent=63 // pred_region
          %s891 = smul.u32 3, %s44
          %s893 = ssub.s32 384, 384
          %894 = vsyncadd [#allocation26], %s893
          %s895 = smul.addr %s891, 128
          %s896 = scalar_lea.hbm %s14, %s895
          %s898 = sshll.u32 [#allocation25], 4
          %s899 = int_to_ptr.vmem [resolvable:$true] %s898
          %901 = dma.vmem_to_hbm [thread:$0]  %s899, 384, %s896, [#allocation26]
        $region128: #{_izhikevich_call.1} parent=63 // pred_fallthru
          _
        // Predicated region
        $region129: #{_izhikevich_call.1} parent=63 // pred_check
          %p902 = pneg %p376
        $region130: #{_izhikevich_call.1} parent=63 // pred_check_branch
          %904 = sbr.rel (%p902) target = $region132
        $region131: #{_izhikevich_call.1} parent=63 // pred_region
          %905 = dma.done [#allocation23], 384
        $region132: #{_izhikevich_call.1} parent=63 // pred_fallthru
          _
        // Predicated region
        $region133: #{_izhikevich_call.1} parent=63 // pred_check
          %p906 = pneg %p402
        $region134: #{_izhikevich_call.1} parent=63 // pred_check_branch
          %908 = sbr.rel (%p906) target = $region136
        $region135: #{_izhikevich_call.1} parent=63 // pred_region
          %909 = dma.done [#allocation23], 384
        $region136: #{_izhikevich_call.1} parent=63 // pred_fallthru
          _
        // Predicated region
        $region137: #{_izhikevich_call.1} parent=63 // pred_check
          %p910 = pneg %p428
        $region138: #{_izhikevich_call.1} parent=63 // pred_check_branch
          %912 = sbr.rel (%p910) target = $region140
        $region139: #{_izhikevich_call.1} parent=63 // pred_region
          %913 = dma.done [#allocation26], 384
        $region140: #{_izhikevich_call.1} parent=63 // pred_fallthru
          _
      $region64: #{_izhikevich_call.1} parent=5 // pred_fallthru
        _
      %p914 = scmp.le.s32.totalorder 2, %s35
      // Predicated region
      $region141: #{_izhikevich_call.1} parent=5 // pred_check
        %p915 = pneg %p914
      $region142: #{_izhikevich_call.1} parent=5 // pred_check_branch
        %917 = sbr.rel (%p915) target = $region144
      $region143: #{_izhikevich_call.1} parent=5 // pred_region
        %s918 = ssub.s32 %s35, 2
        // Predicated region
        $region145: #{_izhikevich_call.1} parent=143 // pred_check
          %p919 = pneg %p356
        $region146: #{_izhikevich_call.1} parent=143 // pred_check_branch
          %921 = sbr.rel (%p919) target = $region148
        $region147: #{_izhikevich_call.1} parent=143 // pred_region
          %s922 = sand.u32 %s341, 1
          %s923 = scalar_lea.sflag [#allocation4], %s922
          %s924 = sand.u32 %s341, 1
          %s925 = smul.addr %s924, 24
          %s926 = scalar_lea.vmem [#allocation21], %s925
          %927 = dma.done %s923, 384
        $region148: #{_izhikevich_call.1} parent=143 // pred_fallthru
          _
      $region144: #{_izhikevich_call.1} parent=5 // pred_fallthru
        _
    $region6: #{_izhikevich_call.1} parent=1 // loop_footer
      %s39 = sadd.s32 1, %s35
    $region7: #{_izhikevich_call.1} parent=1 // loop_footer_branch
      %34 = sbr.rel target = $region3
    $region8: #{_izhikevich_call.1} parent=1 // loop_exit
      _
    %928 = vsyncpa [#allocation3], 1
    %s929 = scalar_lea.sflag [#allocation3], 1
    %930 = vsyncpa %s929, 1
    %931 = vsyncpa [#allocation10], 1
    %932 = vsyncpa [#allocation13], 1
    %933 = vsyncpa [#allocation16], 1
    %934 = vsyncpa [#allocation19], 1
    %935 = vsyncpa [#allocation4], 1
    %s936 = scalar_lea.sflag [#allocation4], 1
    %937 = vsyncpa %s936, 1
    %938 = vsyncpa [#allocation23], 1
    %939 = vsyncpa [#allocation26], 1
    %940 = vsyncpa [#allocation5], 1
    %s941 = scalar_lea.sflag [#allocation5], 1
    %942 = vsyncpa %s941, 1
    %943 = vsyncpa [#allocation6], 1
    %s944 = scalar_lea.sflag [#allocation6], 1
    %945 = vsyncpa %s944, 1

</llo_original>
